<compile_context>
chip_gen: v7x
topology: tpu7x:2x2x1
jax: 0.10.0
libtpu: 0.0.40
codegen_flags: <defaults>
</compile_context>

<pallas_src>
import functools

import jax
import jax.numpy as jnp
from jax.experimental import pallas as pl
from jax.experimental.pallas import tpu as pltpu

# Logical layer sizes of the QNetwork.
H1, H2, OUT = 32, 16, 2
# TPU layout constants.
LANE = 128
SUBLANE = 8
OUT_PAD = 8            # output lanes actually written back (>= OUT, sublane-cheap)


def _round_up(n, m):
    return ((n + m - 1) // m) * m


def _cdiv(a, b):
    return -(-a // b)


def _layout(num_features):
    """Row offsets of each packed tensor inside the (rows, 128) f32 parameter slab."""
    f_pad = _round_up(max(num_features, SUBLANE), SUBLANE)
    w1_off = 0                 # W1 padded to (f_pad, 128)   [valid: (F, 32)]
    w2_off = w1_off + f_pad    # W2 padded to (128, 128)     [valid: (32, 16)]
    w3_off = w2_off + LANE     # W3 padded to (128, 128)     [valid: (16, 2)]
    b_off = w3_off + LANE      # 3 bias rows: b1, b2, b3 (each padded to 128 lanes)
    rows = _round_up(b_off + 3, SUBLANE)
    return f_pad, w1_off, w2_off, w3_off, b_off, rows


def pack_params(params, num_features):
    """Pack w1,b1,w2,b2,w3,b3 into one zero-padded (rows, 128) f32 slab (done once)."""
    f_pad, w1_off, w2_off, w3_off, b_off, rows = _layout(num_features)
    w1 = params["w1"].astype(jnp.float32)
    w2 = params["w2"].astype(jnp.float32)
    w3 = params["w3"].astype(jnp.float32)
    b1 = jnp.reshape(params["b1"], (-1,)).astype(jnp.float32)
    b2 = jnp.reshape(params["b2"], (-1,)).astype(jnp.float32)
    b3 = jnp.reshape(params["b3"], (-1,)).astype(jnp.float32)

    slab = jnp.zeros((rows, LANE), jnp.float32)
    slab = slab.at[w1_off:w1_off + num_features, :H1].set(w1)
    slab = slab.at[w2_off:w2_off + H1, :H2].set(w2)
    slab = slab.at[w3_off:w3_off + H2, :OUT].set(w3)
    slab = slab.at[b_off + 0, :H1].set(b1)
    slab = slab.at[b_off + 1, :H2].set(b2)
    slab = slab.at[b_off + 2, :OUT].set(b3)
    return slab


def _qnetwork_kernel(x_ref, p_ref, o_ref, *,
                     num_features, f_pad, w1_off, w2_off, w3_off, b_off):
    x = x_ref[...]                                    # (tb, F) f32

    # Static slices of the resident parameter slab (all region starts sublane-aligned).
    w1 = p_ref[w1_off:w1_off + num_features, :]       # (F, 128)    valid cols [:32]
    w2 = p_ref[w2_off:w2_off + LANE, :]               # (128, 128)  valid (32, 16)
    w3 = p_ref[w3_off:w3_off + LANE, :]               # (128, 128)  valid (16, 2)
    bias = p_ref[b_off:b_off + SUBLANE, :]            # aligned (8, 128) block
    b1 = bias[0:1, :]
    b2 = bias[1:2, :]
    b3 = bias[2:3, :]

    # Layer 1: Linear(F, 32) + ReLU  (padded weight/bias lanes are exactly 0)
    h1 = jnp.maximum(
        jnp.dot(x, w1, preferred_element_type=jnp.float32) + b1, 0.0)
    # Layer 2: Linear(32, 16) + ReLU
    h2 = jnp.maximum(
        jnp.dot(h1, w2, preferred_element_type=jnp.float32) + b2, 0.0)
    # Layer 3: Linear(16, 2) -> keep only the first 8 lanes for writeback.
    y = jnp.dot(h2, w3, preferred_element_type=jnp.float32) + b3      # (tb, 128)
    o_ref[...] = y[:, :OUT_PAD].astype(o_ref.dtype)                   # (tb, 8) store


def qnetwork_forward(x, param_slab, *, tile_b=2048):
    """x: (B, num_features). param_slab: output of pack_params. Returns (B, 2) f32."""
    B, F = x.shape
    f_pad, w1_off, w2_off, w3_off, b_off, rows = _layout(F)
    assert param_slab.shape == (rows, LANE), (param_slab.shape, (rows, LANE))

    x = x.astype(jnp.float32)

    # Batch-tile selection: even split; replay-sized batches get >=2 (even) balanced
    # tiles so "parallel" shards across v7x's 2 TensorCores.  The ragged last tile is
    # handled by Pallas masking, so no wrapper-side padding copy of x is made.
    b8 = _round_up(B, SUBLANE)
    nsteps = max(1, _cdiv(b8, tile_b))
    if b8 >= 256:
        nsteps = max(nsteps, 2)
        if nsteps % 2:
            nsteps += 1
    tb = _round_up(_cdiv(b8, nsteps), SUBLANE)     # multiple of 8
    nsteps = _cdiv(B, tb)                          # actual grid steps

    kernel = functools.partial(
        _qnetwork_kernel,
        num_features=F, f_pad=f_pad,
        w1_off=w1_off, w2_off=w2_off, w3_off=w3_off, b_off=b_off)

    padded_rows = nsteps * tb
    flops = 2 * padded_rows * (F * LANE + LANE * LANE + LANE * LANE)
    bytes_accessed = B * F * 4 + rows * LANE * 4 + B * OUT_PAD * 4

    out = pl.pallas_call(
        kernel,
        out_shape=jax.ShapeDtypeStruct((B, OUT_PAD), jnp.float32),
        grid=(nsteps,),
        in_specs=[
            pl.BlockSpec((tb, F), lambda i: (i, 0)),       # streamed batch tile, no copy
            pl.BlockSpec((rows, LANE), lambda i: (0, 0)),  # params resident in VMEM
        ],
        out_specs=pl.BlockSpec((tb, OUT_PAD), lambda i: (i, 0)),  # 8-lane writeback
        compiler_params=pltpu.CompilerParams(
            dimension_semantics=("parallel",)),            # megacore on v7x
        cost_estimate=pl.CostEstimate(
            flops=flops, transcendentals=0, bytes_accessed=bytes_accessed),
    )(x, param_slab)

    return out[:, :OUT]


def init_params(key, num_features):
    """PyTorch nn.Linear default init: U[-1/sqrt(fan_in), +1/sqrt(fan_in)].

    Weights stored as (in_features, out_features) so forward is y = x @ W + b.
    """
    dims = [(num_features, H1), (H1, H2), (H2, OUT)]
    params = {}
    for i, (fan_in, fan_out) in enumerate(dims, start=1):
        key, kw, kb = jax.random.split(key, 3)
        bound = 1.0 / jnp.sqrt(jnp.float32(fan_in))
        params[f"w{i}"] = jax.random.uniform(
            kw, (fan_in, fan_out), jnp.float32, minval=-bound, maxval=bound)
        params[f"b{i}"] = jax.random.uniform(
            kb, (1, fan_out), jnp.float32, minval=-bound, maxval=bound)
    return params


def reference_forward(x, params):
    h1 = jnp.maximum(x @ params["w1"] + params["b1"], 0.0)
    h2 = jnp.maximum(h1 @ params["w2"] + params["b2"], 0.0)
    return h2 @ params["w3"] + params["b3"]


if __name__ == "__main__":
    num_features = 4   # CartPole observation size
    batch = 8

    key = jax.random.PRNGKey(0)
    key, kx = jax.random.split(key)
    x = jax.random.normal(kx, (batch, num_features), jnp.float32)
    params = init_params(key, num_features)
    slab = pack_params(params, num_features)   # pack once (reuse across steps)

    # Small (acting-style) batch: single grid step, full-array blocks.
    out = jax.block_until_ready(qnetwork_forward(x, slab))
    ref = reference_forward(x, params)
    assert out.shape == (batch, OUT), out.shape
    assert jnp.allclose(out, ref, atol=1e-5, rtol=1e-5), "mismatch vs JAX reference (small batch)"

    # Replay-style ragged batch: exercises 2 balanced batch tiles, resident weights,
    # ragged-last-tile masking (no wrapper-side x padding) and the 8-lane writeback.
    xb = jax.random.normal(jax.random.PRNGKey(1), (1029, num_features), jnp.float32)
    outb = jax.block_until_ready(qnetwork_forward(xb, slab))
    refb = reference_forward(xb, params)
    assert outb.shape == (1029, OUT), outb.shape
    assert jnp.allclose(outb, refb, atol=1e-4, rtol=1e-4), "mismatch vs JAX reference (large batch)"

    print("KERNEL_OK")
</pallas_src>

<mosaic_0001>
module attributes {stable_mosaic.version = 11 : i64} {
  func.func @_qnetwork_kernel(%arg0: i32, %arg1: memref<8x4xf32, #tpu.memory_space<vmem>>, %arg2: memref<272x128xf32, #tpu.memory_space<vmem>>, %arg3: memref<8x8xf32, #tpu.memory_space<vmem>>) attributes {dimension_semantics = [#tpu.dimension_semantics<parallel>], iteration_bounds = array<i64: 1>, scalar_prefetch = 0 : i64, scratch_operands = 0 : i64, tpu.core_type = #tpu.core_type<tc>, window_params = [{transform_indices = @transform_0, window_bounds = array<i64: 8, 4>}, {pipeline_mode = #tpu.pipeline_mode<synchronous>, transform_indices = @transform_1, window_bounds = array<i64: 272, 128>}, {transform_indices = @transform_2, window_bounds = array<i64: 8, 8>}]} {
    %c0 = arith.constant 0 : index
    %c0_0 = arith.constant 0 : index
    %0 = vector.load %arg1[%c0, %c0_0] : memref<8x4xf32, #tpu.memory_space<vmem>>, vector<8x4xf32>
    %c0_1 = arith.constant 0 : index
    %c0_2 = arith.constant 0 : index
    %1 = vector.load %arg2[%c0_1, %c0_2] : memref<272x128xf32, #tpu.memory_space<vmem>>, vector<4x128xf32>
    %c8 = arith.constant 8 : index
    %c0_3 = arith.constant 0 : index
    %2 = vector.load %arg2[%c8, %c0_3] : memref<272x128xf32, #tpu.memory_space<vmem>>, vector<128x128xf32>
    %c136 = arith.constant 136 : index
    %c0_4 = arith.constant 0 : index
    %3 = vector.load %arg2[%c136, %c0_4] : memref<272x128xf32, #tpu.memory_space<vmem>>, vector<128x128xf32>
    %c264 = arith.constant 264 : index
    %c0_5 = arith.constant 0 : index
    %4 = vector.load %arg2[%c264, %c0_5] : memref<272x128xf32, #tpu.memory_space<vmem>>, vector<8x128xf32>
    %5 = vector.extract_strided_slice %4 {offsets = [0, 0], sizes = [1, 128], strides = [1, 1]} : vector<8x128xf32> to vector<1x128xf32>
    %6 = vector.extract_strided_slice %4 {offsets = [1, 0], sizes = [1, 128], strides = [1, 1]} : vector<8x128xf32> to vector<1x128xf32>
    %7 = vector.extract_strided_slice %4 {offsets = [2, 0], sizes = [1, 128], strides = [1, 1]} : vector<8x128xf32> to vector<1x128xf32>
    %cst = arith.constant dense<0.000000e+00> : vector<8x128xf32>
    %8 = tpu.matmul %0, %1, %cst {dimension_numbers = #tpu.dot_dimension_numbers<[1], [0], [0], [1], [0, 0, 1, 1], [], []>} : vector<8x4xf32>, vector<4x128xf32>, vector<8x128xf32> -> vector<8x128xf32>
    %9 = vector.broadcast %5 : vector<1x128xf32> to vector<8x128xf32>
    %10 = arith.addf %8, %9 : vector<8x128xf32>
    %cst_6 = arith.constant 0.000000e+00 : f32
    %11 = vector.broadcast %cst_6 : f32 to vector<8x128xf32>
    %12 = arith.maximumf %10, %11 : vector<8x128xf32>
    %cst_7 = arith.constant dense<0.000000e+00> : vector<8x128xf32>
    %13 = tpu.matmul %12, %2, %cst_7 {dimension_numbers = #tpu.dot_dimension_numbers<[1], [0], [0], [1], [0, 0, 1, 1], [], []>} : vector<8x128xf32>, vector<128x128xf32>, vector<8x128xf32> -> vector<8x128xf32>
    %14 = vector.broadcast %6 : vector<1x128xf32> to vector<8x128xf32>
    %15 = arith.addf %13, %14 : vector<8x128xf32>
    %cst_8 = arith.constant 0.000000e+00 : f32
    %16 = vector.broadcast %cst_8 : f32 to vector<8x128xf32>
    %17 = arith.maximumf %15, %16 : vector<8x128xf32>
    %cst_9 = arith.constant dense<0.000000e+00> : vector<8x128xf32>
    %18 = tpu.matmul %17, %3, %cst_9 {dimension_numbers = #tpu.dot_dimension_numbers<[1], [0], [0], [1], [0, 0, 1, 1], [], []>} : vector<8x128xf32>, vector<128x128xf32>, vector<8x128xf32> -> vector<8x128xf32>
    %19 = vector.broadcast %7 : vector<1x128xf32> to vector<8x128xf32>
    %20 = arith.addf %18, %19 : vector<8x128xf32>
    %21 = vector.extract_strided_slice %20 {offsets = [0, 0], sizes = [8, 8], strides = [1, 1]} : vector<8x128xf32> to vector<8x8xf32>
    %c0_10 = arith.constant 0 : index
    %c0_11 = arith.constant 0 : index
    %22 = vector.load %arg3[%c0_10, %c0_11] : memref<8x8xf32, #tpu.memory_space<vmem>>, vector<8x8xf32>
    tpu.vector_store %arg3[%c0_10, %c0_11], %21 {strides = array<i32>} : memref<8x8xf32, #tpu.memory_space<vmem>>, vector<8x8xf32>,
    return
  }
  func.func @transform_0(%arg0: i32) -> (i32, i32) {
    %c0_i32 = arith.constant 0 : i32
    %c0_i32_0 = arith.constant 0 : i32
    return %arg0, %c0_i32 : i32, i32
  }
  func.func @transform_1(%arg0: i32) -> (i32, i32) {
    %c0_i32 = arith.constant 0 : i32
    %c0_i32_0 = arith.constant 0 : i32
    %c0_i32_1 = arith.constant 0 : i32
    return %c0_i32, %c0_i32_0 : i32, i32
  }
  func.func @transform_2(%arg0: i32) -> (i32, i32) {
    %c0_i32 = arith.constant 0 : i32
    %c0_i32_0 = arith.constant 0 : i32
    return %arg0, %c0_i32 : i32, i32
  }
}

</mosaic_0001>

<llo_original>
// kernel: tpu_custom_call.1
$region0: #{tpu_custom_call.1}
  #allocation0 [shape = 'u32[]', space=smem, size = 0x4, offset = 0x4, fixed_abs, tag = 'smem constant byte address 0x4 - core index']
  #allocation1 [shape = 'u32[144,128]{1,0:T(1,128)}', space=vmem, size = 0x12000, scoped, tag = 'internal scratch']
  %s0 = inlined_call_operand.vmem [shape: f32[8,4], index: 0, kind: input, shape index: {}]
  %s1 = inlined_call_operand.hbm [shape: f32[272,128], index: 1, kind: input, shape index: {}]
  %s2 = inlined_call_operand.hbm [shape: f32[8,8], index: 2, kind: output, shape index: {}]
  %s3 = sld [smem:[#allocation0]]
  $region22: #{tpu_custom_call.1} parent=0
    _
  %s5 = ssub.s32 1, %s3
  %s6 = scalar_select 0, %s5, %s3
  $region1: #{tpu_custom_call.1} parent=0
    #allocation2 [shape = 'u8[139264]{0}', space=vmem, size = 0x22000, scoped, tag = 'input window, operand 1, single buffered']
    #allocation3 [shape = 's32[1]{0}', space=sflag, size = 0x4, scoped, tag = 'scoped memory for tpu_custom_call.1']
    #allocation4 [shape = 's32[1]{0}', space=sflag, size = 0x4, scoped, tag = 'scoped memory for tpu_custom_call.1']
    #allocation5 [shape = 'u8[4096]{0}', space=vmem, size = 0x1000, scoped, tag = 'output window, operand 0, single buffered']
    %7 = vsyncpa [#allocation3], 0
    %8 = vsyncpa [#allocation4], 0
    // Predicated region
    $region2: #{tpu_custom_call.1} parent=1 // pred_check
      _
    $region3: #{tpu_custom_call.1} parent=1 // pred_check_branch
      %10 = sbr.rel (0) target = $region5
    $region4: #{tpu_custom_call.1} parent=1 // pred_region
      _
    $region5: #{tpu_custom_call.1} parent=1 // pred_fallthru
      _
    // Predicated region
    $region6: #{tpu_custom_call.1} parent=1 // pred_check
      _
    $region7: #{tpu_custom_call.1} parent=1 // pred_check_branch
      %12 = sbr.rel (0) target = $region9
    $region8: #{tpu_custom_call.1} parent=1 // pred_region
      %s14 = ssub.s32 4352, 4352
      %15 = vsyncadd [#allocation3], %s14
      %s16 = sshll.u32 [#allocation2], 4
      %s17 = int_to_ptr.vmem [resolvable:$true] %s16
      %22 = dma.hbm_to_vmem [thread:$0]  %s1, 4352, %s17, [#allocation3], 128, 128, 8
    $region9: #{tpu_custom_call.1} parent=1 // pred_fallthru
      _
    // Predicated region
    $region10: #{tpu_custom_call.1} parent=1 // pred_check
      _
    $region11: #{tpu_custom_call.1} parent=1 // pred_check_branch
      %24 = sbr.rel (0) target = $region13
    $region12: #{tpu_custom_call.1} parent=1 // pred_region
      %25 = dma.done [#allocation3], 4352
    $region13: #{tpu_custom_call.1} parent=1 // pred_fallthru
      _
    %v26 = vld [vmem:[%s0] sm:$0xff]
    %v27 = vld [vmem:[#allocation2] sm:$0xf]
    %v28 = vld [vmem:[#allocation2 + $0x8] sm:$0xff]
    %v29 = vld [vmem:[#allocation2 + $0x10] sm:$0xff]
    %v30 = vld [vmem:[#allocation2 + $0x18] sm:$0xff]
    %v31 = vld [vmem:[#allocation2 + $0x20] sm:$0xff]
    %v32 = vld [vmem:[#allocation2 + $0x28] sm:$0xff]
    %v33 = vld [vmem:[#allocation2 + $0x30] sm:$0xff]
    %v34 = vld [vmem:[#allocation2 + $0x38] sm:$0xff]
    %v35 = vld [vmem:[#allocation2 + $0x40] sm:$0xff]
    %v36 = vld [vmem:[#allocation2 + $0x48] sm:$0xff]
    %v37 = vld [vmem:[#allocation2 + $0x50] sm:$0xff]
    %v38 = vld [vmem:[#allocation2 + $0x58] sm:$0xff]
    %v39 = vld [vmem:[#allocation2 + $0x60] sm:$0xff]
    %v40 = vld [vmem:[#allocation2 + $0x68] sm:$0xff]
    %v41 = vld [vmem:[#allocation2 + $0x70] sm:$0xff]
    %v42 = vld [vmem:[#allocation2 + $0x78] sm:$0xff]
    %v43 = vld [vmem:[#allocation2 + $0x80] sm:$0xff]
    %v44 = vld [vmem:[#allocation2 + $0x88] sm:$0xff]
    %v45 = vld [vmem:[#allocation2 + $0x90] sm:$0xff]
    %v46 = vld [vmem:[#allocation2 + $0x98] sm:$0xff]
    %v47 = vld [vmem:[#allocation2 + $0xa0] sm:$0xff]
    %v48 = vld [vmem:[#allocation2 + $0xa8] sm:$0xff]
    %v49 = vld [vmem:[#allocation2 + $0xb0] sm:$0xff]
    %v50 = vld [vmem:[#allocation2 + $0xb8] sm:$0xff]
    %v51 = vld [vmem:[#allocation2 + $0xc0] sm:$0xff]
    %v52 = vld [vmem:[#allocation2 + $0xc8] sm:$0xff]
    %v53 = vld [vmem:[#allocation2 + $0xd0] sm:$0xff]
    %v54 = vld [vmem:[#allocation2 + $0xd8] sm:$0xff]
    %v55 = vld [vmem:[#allocation2 + $0xe0] sm:$0xff]
    %v56 = vld [vmem:[#allocation2 + $0xe8] sm:$0xff]
    %v57 = vld [vmem:[#allocation2 + $0xf0] sm:$0xff]
    %v58 = vld [vmem:[#allocation2 + $0xf8] sm:$0xff]
    %v59 = vld [vmem:[#allocation2 + $0x100] sm:$0xff]
    %v60 = vld [vmem:[#allocation2 + $0x108] sm:$0xff]
    %v61 = vlaneseq
    %v62 = vshrl.u32 %v61, 7
    %v63 = vsub.s32 0, %v62
    %v64 = vrot.slane %v60, %v63
    %vm65 = vcmask 31744
    %v67 = vsel %vm65, %v26, 0
    %vm69 = vcmask 1043456
    %v71 = vsel %vm69, %v27, 0
    %73 = vmatprep.subr.mxu0 0.0
    %74 = vmatpush1.msra.mxu0 %v71
    %75 = vmatprep.subr.mxu0 0.0
    %76 = vmatpush1.msra.mxu0 0.0
    %77 = vmatprep.subr.mxu0 0.0
    %78 = vmatpush1.msra.mxu0 0.0
    %79 = vmatprep.subr.mxu0 0.0
    %80 = vmatpush1.msra.mxu0 0.0
    %81 = vmatprep.subr.mxu0 0.0
    %82 = vmatpush1.msra.mxu0 0.0
    %83 = vmatprep.subr.mxu0 0.0
    %84 = vmatpush1.msra.mxu0 0.0
    %85 = vmatprep.subr.mxu0 0.0
    %86 = vmatpush1.msra.mxu0 0.0
    %87 = vmatprep.subr.mxu0 0.0
    %88 = vmatpush1.msra.mxu0 0.0
    %89 = vmatprep.subr.mxu0 0.0
    %90 = vmatpush1.msra.mxu0 0.0
    %91 = vmatprep.subr.mxu0 0.0
    %92 = vmatpush1.msra.mxu0 0.0
    %93 = vmatprep.subr.mxu0 0.0
    %94 = vmatpush1.msra.mxu0 0.0
    %95 = vmatprep.subr.mxu0 0.0
    %96 = vmatpush1.msra.mxu0 0.0
    %97 = vmatprep.subr.mxu0 0.0
    %98 = vmatpush1.msra.mxu0 0.0
    %99 = vmatprep.subr.mxu0 0.0
    %100 = vmatpush1.msra.mxu0 0.0
    %101 = vmatprep.subr.mxu0 0.0
    %102 = vmatpush1.msra.mxu0 0.0
    %103 = vmatprep.subr.mxu0 0.0
    %104 = vmatpush1.msra.mxu0 0.0
    %105 = vmatprep.subr.mxu0 0.0
    %106 = vmatpush1.msra.mxu0 0.0
    %107 = vmatprep.subr.mxu0 0.0
    %108 = vmatpush1.msra.mxu0 0.0
    %109 = vmatprep.subr.mxu0 0.0
    %110 = vmatpush1.msra.mxu0 0.0
    %111 = vmatprep.subr.mxu0 0.0
    %112 = vmatpush1.msra.mxu0 0.0
    %113 = vmatprep.subr.mxu0 0.0
    %114 = vmatpush1.msra.mxu0 0.0
    %115 = vmatprep.subr.mxu0 0.0
    %116 = vmatpush1.msra.mxu0 0.0
    %117 = vmatprep.subr.mxu0 0.0
    %118 = vmatpush1.msra.mxu0 0.0
    %119 = vmatprep.subr.mxu0 0.0
    %120 = vmatpush1.msra.mxu0 0.0
    %121 = vmatprep.subr.mxu0 0.0
    %122 = vmatpush1.msra.mxu0 0.0
    %123 = vmatprep.subr.mxu0 0.0
    %124 = vmatpush1.msra.mxu0 0.0
    %125 = vmatprep.subr.mxu0 0.0
    %126 = vmatpush1.msra.mxu0 0.0
    %127 = vmatprep.subr.mxu0 0.0
    %128 = vmatpush1.msra.mxu0 0.0
    %129 = vmatprep.subr.mxu0 0.0
    %130 = vmatpush1.msra.mxu0 0.0
    %131 = vmatprep.subr.mxu0 0.0
    %132 = vmatpush1.msra.mxu0 0.0
    %133 = vmatprep.subr.mxu0 0.0
    %134 = vmatpush1.msra.mxu0 0.0
    %135 = vmatprep.subr.mxu0 0.0
    %136 = vmatpush1.msra.mxu0 0.0
    %137 = vmatprep.mubr.f32.mxu0 0.0
    %138 = vmatmul.mubr.f32.gmra.mrb[0].mxu0 %v67
    %v139 = vpop.f32.mrb[0].mxu0
    %v140 = vadd.f32 %v64, %v139
    %v141 = vpop.f32.mrb[0].mxu0
    %142 = vdwg.mxu0
    %v143 = vmax.f32 %v140, 0.0
    %v144 = vlaneseq
    %v145 = vshrl.u32 %v144, 7
    %v146 = vsub.s32 1, %v145
    %v147 = vrot.slane %v60, %v146
    %148 = vmatprep.subr.mxu0 0.0
    %149 = vmatpush1.msra.mxu0 %v28
    %150 = vmatprep.subr.mxu0 0.0
    %151 = vmatpush1.msra.mxu0 %v29
    %152 = vmatprep.subr.mxu0 0.0
    %153 = vmatpush1.msra.mxu0 %v30
    %154 = vmatprep.subr.mxu0 0.0
    %155 = vmatpush1.msra.mxu0 %v31
    %156 = vmatprep.subr.mxu0 0.0
    %157 = vmatpush1.msra.mxu0 %v32
    %158 = vmatprep.subr.mxu0 0.0
    %159 = vmatpush1.msra.mxu0 %v33
    %160 = vmatprep.subr.mxu0 0.0
    %161 = vmatpush1.msra.mxu0 %v34
    %162 = vmatprep.subr.mxu0 0.0
    %163 = vmatpush1.msra.mxu0 %v35
    %164 = vmatprep.subr.mxu0 0.0
    %165 = vmatpush1.msra.mxu0 %v36
    %166 = vmatprep.subr.mxu0 0.0
    %167 = vmatpush1.msra.mxu0 %v37
    %168 = vmatprep.subr.mxu0 0.0
    %169 = vmatpush1.msra.mxu0 %v38
    %170 = vmatprep.subr.mxu0 0.0
    %171 = vmatpush1.msra.mxu0 %v39
    %172 = vmatprep.subr.mxu0 0.0
    %173 = vmatpush1.msra.mxu0 %v40
    %174 = vmatprep.subr.mxu0 0.0
    %175 = vmatpush1.msra.mxu0 %v41
    %176 = vmatprep.subr.mxu0 0.0
    %177 = vmatpush1.msra.mxu0 %v42
    %178 = vmatprep.subr.mxu0 0.0
    %179 = vmatpush1.msra.mxu0 %v43
    %180 = vmatprep.subr.mxu0 0.0
    %181 = vmatpush1.msra.mxu0 0.0
    %182 = vmatprep.subr.mxu0 0.0
    %183 = vmatpush1.msra.mxu0 0.0
    %184 = vmatprep.subr.mxu0 0.0
    %185 = vmatpush1.msra.mxu0 0.0
    %186 = vmatprep.subr.mxu0 0.0
    %187 = vmatpush1.msra.mxu0 0.0
    %188 = vmatprep.subr.mxu0 0.0
    %189 = vmatpush1.msra.mxu0 0.0
    %190 = vmatprep.subr.mxu0 0.0
    %191 = vmatpush1.msra.mxu0 0.0
    %192 = vmatprep.subr.mxu0 0.0
    %193 = vmatpush1.msra.mxu0 0.0
    %194 = vmatprep.subr.mxu0 0.0
    %195 = vmatpush1.msra.mxu0 0.0
    %196 = vmatprep.subr.mxu0 0.0
    %197 = vmatpush1.msra.mxu0 0.0
    %198 = vmatprep.subr.mxu0 0.0
    %199 = vmatpush1.msra.mxu0 0.0
    %200 = vmatprep.subr.mxu0 0.0
    %201 = vmatpush1.msra.mxu0 0.0
    %202 = vmatprep.subr.mxu0 0.0
    %203 = vmatpush1.msra.mxu0 0.0
    %204 = vmatprep.subr.mxu0 0.0
    %205 = vmatpush1.msra.mxu0 0.0
    %206 = vmatprep.subr.mxu0 0.0
    %207 = vmatpush1.msra.mxu0 0.0
    %208 = vmatprep.subr.mxu0 0.0
    %209 = vmatpush1.msra.mxu0 0.0
    %210 = vmatprep.subr.mxu0 0.0
    %211 = vmatpush1.msra.mxu0 0.0
    %212 = vmatprep.mubr.f32.mxu0 0.0
    %213 = vmatmul.mubr.f32.gmra.mrb[0].mxu0 %v143
    %v214 = vpop.f32.mrb[0].mxu0
    %v215 = vadd.f32 %v147, %v214
    %v216 = vpop.f32.mrb[0].mxu0
    %217 = vdwg.mxu0
    %v218 = vmax.f32 %v215, 0.0
    %v219 = vlaneseq
    %v220 = vshrl.u32 %v219, 7
    %v221 = vsub.s32 2, %v220
    %v222 = vrot.slane %v60, %v221
    %223 = vmatprep.subr.mxu0 0.0
    %224 = vmatpush1.msra.mxu0 %v44
    %225 = vmatprep.subr.mxu0 0.0
    %226 = vmatpush1.msra.mxu0 %v45
    %227 = vmatprep.subr.mxu0 0.0
    %228 = vmatpush1.msra.mxu0 %v46
    %229 = vmatprep.subr.mxu0 0.0
    %230 = vmatpush1.msra.mxu0 %v47
    %231 = vmatprep.subr.mxu0 0.0
    %232 = vmatpush1.msra.mxu0 %v48
    %233 = vmatprep.subr.mxu0 0.0
    %234 = vmatpush1.msra.mxu0 %v49
    %235 = vmatprep.subr.mxu0 0.0
    %236 = vmatpush1.msra.mxu0 %v50
    %237 = vmatprep.subr.mxu0 0.0
    %238 = vmatpush1.msra.mxu0 %v51
    %239 = vmatprep.subr.mxu0 0.0
    %240 = vmatpush1.msra.mxu0 %v52
    %241 = vmatprep.subr.mxu0 0.0
    %242 = vmatpush1.msra.mxu0 %v53
    %243 = vmatprep.subr.mxu0 0.0
    %244 = vmatpush1.msra.mxu0 %v54
    %245 = vmatprep.subr.mxu0 0.0
    %246 = vmatpush1.msra.mxu0 %v55
    %247 = vmatprep.subr.mxu0 0.0
    %248 = vmatpush1.msra.mxu0 %v56
    %249 = vmatprep.subr.mxu0 0.0
    %250 = vmatpush1.msra.mxu0 %v57
    %251 = vmatprep.subr.mxu0 0.0
    %252 = vmatpush1.msra.mxu0 %v58
    %253 = vmatprep.subr.mxu0 0.0
    %254 = vmatpush1.msra.mxu0 %v59
    %255 = vmatprep.subr.mxu0 0.0
    %256 = vmatpush1.msra.mxu0 0.0
    %257 = vmatprep.subr.mxu0 0.0
    %258 = vmatpush1.msra.mxu0 0.0
    %259 = vmatprep.subr.mxu0 0.0
    %260 = vmatpush1.msra.mxu0 0.0
    %261 = vmatprep.subr.mxu0 0.0
    %262 = vmatpush1.msra.mxu0 0.0
    %263 = vmatprep.subr.mxu0 0.0
    %264 = vmatpush1.msra.mxu0 0.0
    %265 = vmatprep.subr.mxu0 0.0
    %266 = vmatpush1.msra.mxu0 0.0
    %267 = vmatprep.subr.mxu0 0.0
    %268 = vmatpush1.msra.mxu0 0.0
    %269 = vmatprep.subr.mxu0 0.0
    %270 = vmatpush1.msra.mxu0 0.0
    %271 = vmatprep.subr.mxu0 0.0
    %272 = vmatpush1.msra.mxu0 0.0
    %273 = vmatprep.subr.mxu0 0.0
    %274 = vmatpush1.msra.mxu0 0.0
    %275 = vmatprep.subr.mxu0 0.0
    %276 = vmatpush1.msra.mxu0 0.0
    %277 = vmatprep.subr.mxu0 0.0
    %278 = vmatpush1.msra.mxu0 0.0
    %279 = vmatprep.subr.mxu0 0.0
    %280 = vmatpush1.msra.mxu0 0.0
    %281 = vmatprep.subr.mxu0 0.0
    %282 = vmatpush1.msra.mxu0 0.0
    %283 = vmatprep.subr.mxu0 0.0
    %284 = vmatpush1.msra.mxu0 0.0
    %285 = vmatprep.subr.mxu0 0.0
    %286 = vmatpush1.msra.mxu0 0.0
    %287 = vmatprep.mubr.f32.mxu0 0.0
    %288 = vmatmul.mubr.f32.gmra.mrb[0].mxu0 %v218
    %v289 = vpop.f32.mrb[0].mxu0
    %v290 = vadd.f32 %v222, %v289
    %v291 = vpop.f32.mrb[0].mxu0
    %292 = vdwg.mxu0
    %vm293 = vcmask 64512
    %294 = vst.msk [vmem:[#allocation5] sm:$0xff] %vm293, %v290
    // Predicated region
    $region14: #{tpu_custom_call.1} parent=1 // pred_check
      _
    $region15: #{tpu_custom_call.1} parent=1 // pred_check_branch
      %296 = sbr.rel (0) target = $region17
    $region16: #{tpu_custom_call.1} parent=1 // pred_region
      %s298 = ssub.s32 128, 128
      %299 = vsyncadd [#allocation4], %s298
      %s301 = sshll.u32 [#allocation5], 4
      %s302 = int_to_ptr.vmem [resolvable:$true] %s301
      %304 = dma.vmem_to_hbm [thread:$0]  %s302, 128, %s2, [#allocation4]
    $region17: #{tpu_custom_call.1} parent=1 // pred_fallthru
      _
    // Predicated region
    $region18: #{tpu_custom_call.1} parent=1 // pred_check
      _
    $region19: #{tpu_custom_call.1} parent=1 // pred_check_branch
      %306 = sbr.rel (0) target = $region21
    $region20: #{tpu_custom_call.1} parent=1 // pred_region
      %307 = dma.done [#allocation4], 128
    $region21: #{tpu_custom_call.1} parent=1 // pred_fallthru
      _
    %308 = vsyncpa [#allocation3], 1
    %309 = vsyncpa [#allocation4], 1

</llo_original>
